<compile_context>
chip_gen: v5e
topology: v5e:2x2
jax: 0.10.0
libtpu: 0.0.40
codegen_flags: <defaults>
</compile_context>

<pallas_src>
import math
import functools

import jax
import jax.numpy as jnp
from jax.experimental import pallas as pl
from jax.experimental.pallas import tpu as pltpu

EMBEDDING_SIZE = 512
MAX_LEN = 5000


# ---------------------------------------------------------------------------
# Precompute the sinusoidal table (equivalent of the torch register_buffer).
# Dense shape: [max_len, EMBED]  (no singleton middle dim).
# ---------------------------------------------------------------------------
def make_positional_encoding_table(max_len=MAX_LEN, d_model=EMBEDDING_SIZE,
                                   dtype=jnp.float32):
    position = jnp.arange(max_len, dtype=jnp.float32)[:, None]              # (L, 1)
    div_term = jnp.exp(
        jnp.arange(0, d_model, 2, dtype=jnp.float32) * (-math.log(10000.0) / d_model)
    )                                                                        # (E/2,)
    angles = position * div_term                                             # (L, E/2)
    pe = jnp.zeros((max_len, d_model), jnp.float32)
    pe = pe.at[:, 0::2].set(jnp.sin(angles))
    pe = pe.at[:, 1::2].set(jnp.cos(angles))
    return pe.astype(dtype)                                                  # (L, E)


# ---------------------------------------------------------------------------
# Kernels
# ---------------------------------------------------------------------------
def _broadcast_pe(pe_tile, batch):
    # pe_tile: (ts, E) -> (ts, B*E); column b*E + e holds pe[:, e].
    # Lane-dim concatenate (cheap, supported by Mosaic; no sublane relayout).
    if batch == 1:
        return pe_tile
    return jnp.concatenate([pe_tile] * batch, axis=-1)


def _add_pe_kernel(x_ref, pe_ref, o_ref, *, batch):
    # x_ref/o_ref: (ts, B*E) lane-dense; pe_ref: (ts, E).
    pe_wide = _broadcast_pe(pe_ref[...], batch)
    o_ref[...] = (x_ref[...] + pe_wide).astype(o_ref.dtype)


def _hash_bits_u32(shape, seed_u32):
    """Counter-based per-element uint32 hash (murmur3 fmix32 finalizer)."""
    rows = jax.lax.broadcasted_iota(jnp.uint32, shape, 0)
    cols = jax.lax.broadcasted_iota(jnp.uint32, shape, 1)
    x = rows * jnp.uint32(0x9E3779B1) + cols * jnp.uint32(0x85EBCA77) + seed_u32
    x = x ^ (x >> 16)
    x = x * jnp.uint32(0x85EBCA6B)
    x = x ^ (x >> 13)
    x = x * jnp.uint32(0xC2B2AE35)
    x = x ^ (x >> 16)
    return x


def _add_pe_dropout_kernel(seed_ref, x_ref, pe_ref, o_ref, *, batch, rate):
    pe_wide = _broadcast_pe(pe_ref[...], batch)
    y = x_ref[...] + pe_wide

    # Per-tile distinct, well-mixed seed (multiplicative hash of the tile id).
    tile_u = pl.program_id(0).astype(jnp.uint32)
    seed_u = (seed_ref[0].astype(jnp.uint32) * jnp.uint32(0x9E3779B1)) ^ (
        tile_u * jnp.uint32(0x27D4EB2F)
    )
    bits = _hash_bits_u32(y.shape, seed_u)

    # Integer threshold compare on raw bits: P(keep) = 1 - rate.
    thr = jnp.uint32(min(int(round(rate * 4294967296.0)), 4294967295))
    keep = bits >= thr
    scale = jnp.asarray(1.0 / (1.0 - rate), y.dtype)        # inverted dropout
    zero = jnp.zeros((), y.dtype)
    o_ref[...] = jnp.where(keep, y * scale, zero).astype(o_ref.dtype)


# ---------------------------------------------------------------------------
# Tile-size / VMEM budgeting
# ---------------------------------------------------------------------------
def _round_up(n, m):
    return ((n + m - 1) // m) * m


def _choose_seq_tile(S, row_bytes, block_budget_bytes):
    """Pick a sequence tile: big enough for HBM roofline, small enough for VMEM,
    and keeping >= 2 grid steps when possible (v7x has 2 TensorCores)."""
    if S <= 8:
        return S
    # Per-step block VMEM ~= 2*(x) + 2*(out) = 4 * ts * row_bytes  (pe is 1/B of x).
    ts = block_budget_bytes // (4 * row_bytes)
    ts = min(ts, _round_up(pl.cdiv(S, 2), 8))          # guarantee >= 2 grid steps
    ts = max(8, (ts // 8) * 8)                         # sublane-aligned
    if ts >= S:
        return S
    return ts


# ---------------------------------------------------------------------------
# Wrapper reproducing PositionalEncoding.forward
# ---------------------------------------------------------------------------
def add_positional_encoding(x, pe_table, *, dropout_rate=0.1, training=False,
                            seed=0, ts=None, block_budget_bytes=24 << 20):
    S, B, E = x.shape
    assert pe_table.ndim == 2 and pe_table.shape[1] == E
    assert S <= pe_table.shape[0]
    if pe_table.dtype != x.dtype:
        pe_table = pe_table.astype(x.dtype)            # match activation dtype

    # Lane/sublane-dense 2-D view (free relabeling of contiguous trailing dims).
    x2d = x.reshape(S, B * E)

    itemsize = jnp.dtype(x.dtype).itemsize
    row_bytes = B * E * itemsize
    if ts is None:
        ts = _choose_seq_tile(S, row_bytes, block_budget_bytes)
    grid = (pl.cdiv(S, ts),)

    # Explicit scoped-VMEM limit (v5e default is only 16 MiB; v7x physical 64 MiB).
    vmem_need = 4 * ts * row_bytes + 2 * ts * E * itemsize + (2 << 20)
    cp = pltpu.CompilerParams(
        dimension_semantics=("parallel",),
        vmem_limit_bytes=int(min(max(vmem_need, 16 << 20), 64 << 20)),
    )

    x_spec = pl.BlockSpec((ts, B * E), lambda i, *_: (i, 0))
    pe_spec = pl.BlockSpec((ts, E), lambda i, *_: (i, 0))     # full table in; rows via index_map
    out_spec = pl.BlockSpec((ts, B * E), lambda i, *_: (i, 0))
    out_shape = jax.ShapeDtypeStruct((S, B * E), x.dtype)

    if (not training) or dropout_rate == 0.0:
        # Eval mode: dropout is identity (matches torch nn.Dropout.eval()).
        out2d = pl.pallas_call(
            functools.partial(_add_pe_kernel, batch=B),
            out_shape=out_shape,
            grid_spec=pltpu.PrefetchScalarGridSpec(
                num_scalar_prefetch=0,
                grid=grid,
                in_specs=[x_spec, pe_spec],
                out_specs=out_spec,
            ),
            compiler_params=cp,
        )(x2d, pe_table)
    else:
        # Training mode: fused add + inverted dropout (in-kernel hash PRNG).
        seed_arr = jnp.asarray([seed], dtype=jnp.int32)
        kernel = functools.partial(_add_pe_dropout_kernel, batch=B,
                                   rate=float(dropout_rate))
        out2d = pl.pallas_call(
            kernel,
            out_shape=out_shape,
            grid_spec=pltpu.PrefetchScalarGridSpec(
                num_scalar_prefetch=1,
                grid=grid,
                in_specs=[x_spec, pe_spec],
                out_specs=out_spec,
            ),
            compiler_params=cp,
        )(seed_arr, x2d, pe_table)

    return out2d.reshape(S, B, E)


if __name__ == "__main__":
    key = jax.random.PRNGKey(0)
    S, B = 8, 2                                         # [seq_len, batch, EMBED]
    x = jax.random.normal(key, (S, B, EMBEDDING_SIZE), jnp.float32)
    pe_table = make_positional_encoding_table()

    # Eval mode (deterministic): out = x + pe[:S]
    out_eval = add_positional_encoding(x, pe_table, training=False)
    jax.block_until_ready(out_eval)
    ref = x + pe_table[:S][:, None, :]
    assert out_eval.shape == (S, B, EMBEDDING_SIZE)
    assert jnp.allclose(out_eval, ref, atol=1e-6), "positional-encoding add mismatch"

    # Training mode (stochastic inverted dropout).
    p = 0.1
    out_train = add_positional_encoding(
        x, pe_table, dropout_rate=p, training=True, seed=1234
    )
    jax.block_until_ready(out_train)
    assert out_train.shape == (S, B, EMBEDDING_SIZE)
    assert bool(jnp.isfinite(out_train).all())
    # Surviving elements must equal (x + pe) / (1 - p); dropped ones are exactly 0.
    scaled_ref = ref / (1.0 - p)
    kept = out_train != 0
    assert bool(
        jnp.allclose(jnp.where(kept, out_train, scaled_ref), scaled_ref,
                     atol=1e-5, rtol=1e-5)
    ), "dropout scaling mismatch"

    print("KERNEL_OK")
</pallas_src>

<mosaic_0001>
module attributes {stable_mosaic.version = 11 : i64} {
  func.func @_add_pe_kernel(%arg0: i32, %arg1: memref<8x1024xf32, #tpu.memory_space<vmem>>, %arg2: memref<8x512xf32, #tpu.memory_space<vmem>>, %arg3: memref<8x1024xf32, #tpu.memory_space<vmem>>) attributes {dimension_semantics = [#tpu.dimension_semantics<parallel>], iteration_bounds = array<i64: 1>, scalar_prefetch = 0 : i64, scratch_operands = 0 : i64, tpu.core_type = #tpu.core_type<tc>, window_params = [{transform_indices = @transform_0, window_bounds = array<i64: 8, 1024>}, {transform_indices = @transform_1, window_bounds = array<i64: 8, 512>}, {transform_indices = @transform_2, window_bounds = array<i64: 8, 1024>}]} {
    %c0 = arith.constant 0 : index
    %c0_0 = arith.constant 0 : index
    %0 = vector.load %arg2[%c0, %c0_0] : memref<8x512xf32, #tpu.memory_space<vmem>>, vector<8x512xf32>
    %1 = tpu.concatenate %0, %0 in 1 : vector<8x512xf32>, vector<8x512xf32> -> vector<8x1024xf32>
    %c0_1 = arith.constant 0 : index
    %c0_2 = arith.constant 0 : index
    %2 = vector.load %arg1[%c0_1, %c0_2] : memref<8x1024xf32, #tpu.memory_space<vmem>>, vector<8x1024xf32>
    %3 = arith.addf %2, %1 : vector<8x1024xf32>
    %c0_3 = arith.constant 0 : index
    %c0_4 = arith.constant 0 : index
    %4 = vector.load %arg3[%c0_3, %c0_4] : memref<8x1024xf32, #tpu.memory_space<vmem>>, vector<8x1024xf32>
    tpu.vector_store %arg3[%c0_3, %c0_4], %3 {strides = array<i32>} : memref<8x1024xf32, #tpu.memory_space<vmem>>, vector<8x1024xf32>,
    return
  }
  func.func @transform_0(%arg0: i32) -> (i32, i32) {
    %c0_i32 = arith.constant 0 : i32
    %c0_i32_0 = arith.constant 0 : i32
    return %arg0, %c0_i32 : i32, i32
  }
  func.func @transform_1(%arg0: i32) -> (i32, i32) {
    %c0_i32 = arith.constant 0 : i32
    %c0_i32_0 = arith.constant 0 : i32
    return %arg0, %c0_i32 : i32, i32
  }
  func.func @transform_2(%arg0: i32) -> (i32, i32) {
    %c0_i32 = arith.constant 0 : i32
    %c0_i32_0 = arith.constant 0 : i32
    return %arg0, %c0_i32 : i32, i32
  }
}

</mosaic_0001>

<llo_original>
// kernel: tpu_custom_call.1
$region0: #{tpu_custom_call.1}
  #allocation0 [shape = 'u32[]', space=smem, size = 0x4, offset = 0x4, fixed_abs, tag = 'smem constant byte address 0x4 - core index']
  #allocation1 [shape = 'u32[72,128]{1,0:T(1,128)}', space=vmem, size = 0x9000, scoped, tag = 'internal scratch']
  %s0 = inlined_call_operand.hbm [shape: f32[8,1024], index: 0, kind: input, shape index: {}]
  %s1 = inlined_call_operand.hbm [shape: f32[5000,512], index: 1, kind: input, shape index: {}]
  %s2 = inlined_call_operand.hbm [shape: f32[8,1024], index: 2, kind: output, shape index: {}]
  %s3 = sld [smem:[#allocation0]]
  $region26: #{tpu_custom_call.1} parent=0
    _
  %s5 = ssub.s32 1, %s3
  %s6 = scalar_select 0, %s5, %s3
  $region1: #{tpu_custom_call.1} parent=0
    #allocation2 [shape = 'u8[32768]{0}', space=vmem, size = 0x8000, scoped, tag = 'input window, operand 0, single buffered']
    #allocation3 [shape = 's32[1]{0}', space=sflag, size = 0x4, scoped, tag = 'scoped memory for tpu_custom_call.1']
    #allocation4 [shape = 's32[1]{0}', space=sflag, size = 0x4, scoped, tag = 'scoped memory for tpu_custom_call.1']
    #allocation5 [shape = 'u8[16384]{0}', space=vmem, size = 0x4000, scoped, tag = 'input window, operand 1, single buffered']
    #allocation6 [shape = 's32[1]{0}', space=sflag, size = 0x4, scoped, tag = 'scoped memory for tpu_custom_call.1']
    #allocation7 [shape = 'u8[32768]{0}', space=vmem, size = 0x8000, scoped, tag = 'output window, operand 0, single buffered']
    %7 = vsyncpa [#allocation3], 0
    %8 = vsyncpa [#allocation6], 0
    %9 = vsyncpa [#allocation4], 0
    // Predicated region
    $region2: #{tpu_custom_call.1} parent=1 // pred_check
      _
    $region3: #{tpu_custom_call.1} parent=1 // pred_check_branch
      %11 = sbr.rel (0) target = $region5
    $region4: #{tpu_custom_call.1} parent=1 // pred_region
      %13 = vsyncadd [#allocation3], 0
      %s15 = sshll.u32 %s0, 4
      %s16 = int_to_ptr.hbm [resolvable:$true] %s15
      %s17 = sshll.u32 [#allocation2], 4
      %s18 = int_to_ptr.vmem [resolvable:$true] %s17
      %20 = dma.hbm_to_vmem [thread:$0]  %s16, 1024, %s18, [#allocation3]
    $region5: #{tpu_custom_call.1} parent=1 // pred_fallthru
      _
    // Predicated region
    $region6: #{tpu_custom_call.1} parent=1 // pred_check
      _
    $region7: #{tpu_custom_call.1} parent=1 // pred_check_branch
      %22 = sbr.rel (0) target = $region9
    $region8: #{tpu_custom_call.1} parent=1 // pred_region
      %24 = vsyncadd [#allocation6], 0
      %s26 = sshll.u32 %s1, 4
      %s27 = int_to_ptr.hbm [resolvable:$true] %s26
      %s28 = sshll.u32 [#allocation5], 4
      %s29 = int_to_ptr.vmem [resolvable:$true] %s28
      %31 = dma.hbm_to_vmem [thread:$0]  %s27, 512, %s29, [#allocation6]
    $region9: #{tpu_custom_call.1} parent=1 // pred_fallthru
      _
    // Predicated region
    $region10: #{tpu_custom_call.1} parent=1 // pred_check
      _
    $region11: #{tpu_custom_call.1} parent=1 // pred_check_branch
      %33 = sbr.rel (0) target = $region13
    $region12: #{tpu_custom_call.1} parent=1 // pred_region
      %35 = dma.done [#allocation3], 1024
    $region13: #{tpu_custom_call.1} parent=1 // pred_fallthru
      _
    // Predicated region
    $region14: #{tpu_custom_call.1} parent=1 // pred_check
      _
    $region15: #{tpu_custom_call.1} parent=1 // pred_check_branch
      %37 = sbr.rel (0) target = $region17
    $region16: #{tpu_custom_call.1} parent=1 // pred_region
      %39 = dma.done [#allocation6], 512
    $region17: #{tpu_custom_call.1} parent=1 // pred_fallthru
      _
    %v40 = vld [vmem:[#allocation5] sm:$0xff]
    %v41 = vld [vmem:[#allocation5 + $0x8] sm:$0xff]
    %v42 = vld [vmem:[#allocation5 + $0x10] sm:$0xff]
    %v43 = vld [vmem:[#allocation5 + $0x18] sm:$0xff]
    %v44 = vld [vmem:[#allocation2] sm:$0xff]
    %v45 = vld [vmem:[#allocation2 + $0x8] sm:$0xff]
    %v46 = vld [vmem:[#allocation2 + $0x10] sm:$0xff]
    %v47 = vld [vmem:[#allocation2 + $0x18] sm:$0xff]
    %v48 = vld [vmem:[#allocation2 + $0x20] sm:$0xff]
    %v49 = vld [vmem:[#allocation2 + $0x28] sm:$0xff]
    %v50 = vld [vmem:[#allocation2 + $0x30] sm:$0xff]
    %v51 = vld [vmem:[#allocation2 + $0x38] sm:$0xff]
    %v52 = vadd.f32 %v44, %v40
    %v53 = vadd.f32 %v45, %v41
    %v54 = vadd.f32 %v46, %v42
    %v55 = vadd.f32 %v47, %v43
    %v56 = vadd.f32 %v48, %v40
    %v57 = vadd.f32 %v49, %v41
    %v58 = vadd.f32 %v50, %v42
    %v59 = vadd.f32 %v51, %v43
    %60 = vst [vmem:[#allocation7] sm:$0xff] %v52
    %61 = vst [vmem:[#allocation7 + $0x8] sm:$0xff] %v53
    %62 = vst [vmem:[#allocation7 + $0x10] sm:$0xff] %v54
    %63 = vst [vmem:[#allocation7 + $0x18] sm:$0xff] %v55
    %64 = vst [vmem:[#allocation7 + $0x20] sm:$0xff] %v56
    %65 = vst [vmem:[#allocation7 + $0x28] sm:$0xff] %v57
    %66 = vst [vmem:[#allocation7 + $0x30] sm:$0xff] %v58
    %67 = vst [vmem:[#allocation7 + $0x38] sm:$0xff] %v59
    // Predicated region
    $region18: #{tpu_custom_call.1} parent=1 // pred_check
      _
    $region19: #{tpu_custom_call.1} parent=1 // pred_check_branch
      %69 = sbr.rel (0) target = $region21
    $region20: #{tpu_custom_call.1} parent=1 // pred_region
      %71 = vsyncadd [#allocation4], 0
      %s73 = sshll.u32 [#allocation7], 4
      %s74 = int_to_ptr.vmem [resolvable:$true] %s73
      %s75 = sshll.u32 %s2, 4
      %s76 = int_to_ptr.hbm [resolvable:$true] %s75
      %78 = dma.vmem_to_hbm [thread:$0]  %s74, 1024, %s76, [#allocation4]
    $region21: #{tpu_custom_call.1} parent=1 // pred_fallthru
      _
    // Predicated region
    $region22: #{tpu_custom_call.1} parent=1 // pred_check
      _
    $region23: #{tpu_custom_call.1} parent=1 // pred_check_branch
      %80 = sbr.rel (0) target = $region25
    $region24: #{tpu_custom_call.1} parent=1 // pred_region
      %82 = dma.done [#allocation4], 1024
    $region25: #{tpu_custom_call.1} parent=1 // pred_fallthru
      _
    %83 = vsyncpa [#allocation3], 1
    %84 = vsyncpa [#allocation6], 1
    %85 = vsyncpa [#allocation4], 1

</llo_original>
